<compile_context>
chip_gen: v7x
topology: tpu7x:2x2x1
jax: 0.10.0
libtpu: 0.0.40
codegen_flags: <defaults>
</compile_context>

<pallas_src>
import functools
import math

import jax
import jax.numpy as jnp
from jax import lax
from jax.experimental import pallas as pl
from jax.experimental.pallas import tpu as pltpu

_INV_SQRT2 = 0.7071067811865476


def _round_up(v: int, m: int) -> int:
    return ((v + m - 1) // m) * m


def _cdiv(a: int, b: int) -> int:
    return (a + b - 1) // b


def _vmem_capacity_bytes() -> int:
    try:
        return int(pltpu.get_tpu_info().vmem_capacity_bytes)
    except Exception:
        return 64 << 20  # conservative default: v7x per-TC VMEM


def _device_kind() -> str:
    try:
        return jax.devices()[0].device_kind.lower()
    except Exception:
        return ""


def _pad2(a, rows, cols):
    pr, pc = rows - a.shape[0], cols - a.shape[1]
    if pr == 0 and pc == 0:
        return a
    return jnp.pad(a, ((0, pr), (0, pc)))


def _pad1(a, nn):
    p = nn - a.shape[0]
    if p == 0:
        return a
    return jnp.pad(a, (0, p))


def _choose_tiles(n, in_p, hid_p, out_p, act_b, w_b, tile_n, tile_h):
    """Pick static tile sizes + vmem limit from the actual hardware."""
    vmem_cap = _vmem_capacity_bytes()
    kind = _device_kind()
    budget = max(vmem_cap - (16 << 20), 16 << 20)  # leave Mosaic scratch headroom

    # Hidden tile: largest standard size that divides the 128-aligned hidden
    # dim, so weight matrices never need re-padding (no per-call HBM copies).
    cands = ([tile_h] if tile_h else []) + [2048, 1024, 512, 256, 128]
    tile_h_eff = 128
    for cand in cands:
        if cand >= 128 and cand % 128 == 0 and hid_p % cand == 0:
            tile_h_eff = cand
            break
    tile_h_eff = min(tile_h_eff, hid_p)

    # Row tile: sized for MXU-roofline arithmetic intensity per generation.
    if tile_n is None:
        if "v5" in kind:
            tile_n = 256            # v5e balance point ~240 fl/B
        elif vmem_cap < (96 << 20):
            tile_n = 512            # v7x-class: 64 MiB per-TC VMEM
        else:
            tile_n = 1024           # v6e-class: needs ~640 fl/B to feed the MXU
    tile_n_eff = max(8, _round_up(min(tile_n, _round_up(max(n, 1), 8)), 8))
    # Keep >= 2 row steps when possible so the "parallel" axis can shard
    # across both TensorCores on v7x.
    if n > 256 and _cdiv(_round_up(n, 8), tile_n_eff) < 2:
        tile_n_eff = _round_up(_cdiv(n, 2), 8)

    def footprint(tn, th):
        blk = (tn * in_p * act_b          # x block
               + in_p * th * w_b          # w1 block
               + th * w_b                 # b1 block
               + th * out_p * w_b         # w2 block
               + out_p * w_b              # b2 block
               + tn * out_p * act_b)      # out block
        return 2 * blk + tn * out_p * 4   # double-buffered blocks + f32 acc

    # Shrink until the footprint fits the per-generation VMEM budget.
    while footprint(tile_n_eff, tile_h_eff) > budget and tile_n_eff > 256:
        tile_n_eff = max(256, _round_up(tile_n_eff // 2, 8))
    while footprint(tile_n_eff, tile_h_eff) > budget and tile_h_eff > 128:
        tile_h_eff //= 2                  # halving preserves divisibility of hid_p
    while footprint(tile_n_eff, tile_h_eff) > budget and tile_n_eff > 8:
        tile_n_eff = max(8, _round_up(tile_n_eff // 2, 8))

    vmem_limit = max(footprint(tile_n_eff, tile_h_eff) + (8 << 20), 32 << 20)
    vmem_limit = min(vmem_limit, vmem_cap - (8 << 20))
    return int(tile_n_eff), int(tile_h_eff), int(vmem_limit)


def _make_mlp_kernel(gelu_tanh: bool, cast_to_bf16: bool):
    def kernel(x_ref, w1_ref, b1_ref, w2_ref, b2_ref, o_ref, acc_ref):
        h_idx = pl.program_id(1)
        last = pl.num_programs(1) - 1

        @pl.when(h_idx == 0)
        def _init():
            acc_ref[...] = jnp.zeros_like(acc_ref)

        x = x_ref[...]
        w1 = w1_ref[...]
        w2 = w2_ref[...]
        if cast_to_bf16:
            x = x.astype(jnp.bfloat16)
            w1 = w1.astype(jnp.bfloat16)
            w2 = w2.astype(jnp.bfloat16)

        # fc1: native/bf16 operands straight to the MXU, f32 accumulation.
        h = jnp.dot(x, w1, preferred_element_type=jnp.float32)
        h = h + b1_ref[...].astype(jnp.float32)

        if gelu_tanh:
            # tanh approximation -> EUP slot (free when MXU/VALU bound).
            h = jax.nn.gelu(h, approximate=True)
        else:
            # Exact erf GELU (matches PyTorch nn.GELU default).
            h = 0.5 * h * (1.0 + lax.erf(h * _INV_SQRT2))

        # drop1: eval-mode dropout == identity.
        # TODO(synk): training-mode dropout via pltpu.prng_seed / prng_random_bits.

        # fc2 partial over this hidden block.
        partial = jnp.dot(h.astype(w2.dtype), w2, preferred_element_type=jnp.float32)

        @pl.when(h_idx != last)
        def _accum():
            acc_ref[...] += partial

        @pl.when(h_idx == last)
        def _finalize():
            # Fused finalize: single accumulator read, no extra RMW on the
            # last hidden step.
            o_ref[...] = (
                acc_ref[...] + partial + b2_ref[...].astype(jnp.float32)
            ).astype(o_ref.dtype)

    return kernel


@functools.partial(
    jax.jit,
    static_argnames=("tile_n", "tile_h", "gelu_tanh", "cast_to_bf16", "vmem_limit"),
)
def _mlp_pallas_impl(x, w1, b1, w2, b2, *, tile_n, tile_h, gelu_tanh,
                     cast_to_bf16, vmem_limit):
    *lead, in_dim = x.shape
    hidden = w1.shape[1]
    out_dim = w2.shape[1]
    n = math.prod(lead) if lead else 1
    x2d = x.reshape(n, in_dim)

    # Lane-dense padding: feature dims -> multiples of 128; tile_h divides hid_p
    # by construction, so weights are only 128-aligned (usually a no-op).
    in_p = _round_up(in_dim, 128)
    out_p = _round_up(out_dim, 128)
    hid_p = _round_up(hidden, 128)
    n_p = _round_up(n, tile_n)

    x_pad = _pad2(x2d, n_p, in_p)
    w1_pad = _pad2(w1, in_p, hid_p)
    b1_pad = _pad1(b1, hid_p).reshape(1, hid_p)
    w2_pad = _pad2(w2, hid_p, out_p)
    b2_pad = _pad1(b2, out_p).reshape(1, out_p)

    row_steps = n_p // tile_n
    hid_steps = hid_p // tile_h
    grid = (row_steps, hid_steps)

    act_b = jnp.dtype(x.dtype).itemsize
    w_b = jnp.dtype(w1.dtype).itemsize
    cost = pl.CostEstimate(
        flops=2 * n_p * (in_p * hid_p + hid_p * out_p),
        transcendentals=n_p * hid_p,
        bytes_accessed=int(
            n_p * in_p * act_b
            # Weights are re-streamed once per row tile, not read once.
            + row_steps * (w1_pad.size + w2_pad.size) * w_b
            + (b1_pad.size + b2_pad.size) * w_b
            + n_p * out_p * act_b
        ),
    )

    out_pad = pl.pallas_call(
        _make_mlp_kernel(gelu_tanh, cast_to_bf16),
        out_shape=jax.ShapeDtypeStruct((n_p, out_p), x.dtype),
        grid_spec=pltpu.PrefetchScalarGridSpec(
            num_scalar_prefetch=0,
            grid=grid,
            in_specs=[
                # activations: row-tiled, full (padded) feature dim.
                pl.BlockSpec((tile_n, in_p), lambda i, h: (i, 0)),
                # fc1 weights/bias: tiled over hidden columns.
                # TODO(synk): consider pipeline_mode=pl.Buffered(3) on v5e when
                # per-step DMA ~ compute.
                pl.BlockSpec((in_p, tile_h), lambda i, h: (0, h)),
                pl.BlockSpec((1, tile_h), lambda i, h: (0, h)),
                # fc2 weights: tiled over hidden rows; bias constant.
                pl.BlockSpec((tile_h, out_p), lambda i, h: (h, 0)),
                pl.BlockSpec((1, out_p), lambda i, h: (0, 0)),
            ],
            out_specs=pl.BlockSpec((tile_n, out_p), lambda i, h: (i, 0)),
            scratch_shapes=[pltpu.VMEM((tile_n, out_p), jnp.float32)],
        ),
        compiler_params=pltpu.CompilerParams(
            dimension_semantics=("parallel", "arbitrary"),
            vmem_limit_bytes=vmem_limit,
        ),
        cost_estimate=cost,
    )(x_pad, w1_pad, b1_pad, w2_pad, b2_pad)

    out2d = out_pad[:n, :out_dim]
    return out2d.reshape(*lead, out_dim)


def mlp_pallas(x, w1, b1, w2, b2, *, tile_n=None, tile_h=None,
               gelu_mode="auto", cast_to_bf16=False):
    """x: (..., in_dim). w1: (in, hidden), b1: (hidden,), w2: (hidden, out),
    b2: (out,). Weights stored transposed vs PyTorch so the kernel computes
    y = gelu(x @ W1 + b1) @ W2 + b2. gelu_mode: 'exact' | 'tanh' | 'auto'
    (auto = exact erf for f32, tanh for bf16 / cast_to_bf16)."""
    *lead, in_dim = x.shape
    hidden = w1.shape[1]
    out_dim = w2.shape[1]
    n = math.prod(lead) if lead else 1

    act_b = jnp.dtype(x.dtype).itemsize
    w_b = jnp.dtype(w1.dtype).itemsize
    in_p = _round_up(in_dim, 128)
    out_p = _round_up(out_dim, 128)
    hid_p = _round_up(hidden, 128)

    tile_n_eff, tile_h_eff, vmem_limit = _choose_tiles(
        n, in_p, hid_p, out_p, act_b, w_b, tile_n, tile_h)

    if gelu_mode == "auto":
        gelu_tanh = bool(x.dtype == jnp.bfloat16) or bool(cast_to_bf16)
    else:
        gelu_tanh = (gelu_mode == "tanh")

    return _mlp_pallas_impl(
        x, w1, b1, w2, b2,
        tile_n=tile_n_eff, tile_h=tile_h_eff, gelu_tanh=gelu_tanh,
        cast_to_bf16=bool(cast_to_bf16), vmem_limit=vmem_limit)


def _reference(x, w1, b1, w2, b2, approximate=False):
    xf = x.astype(jnp.float32)
    h = xf @ w1.astype(jnp.float32) + b1.astype(jnp.float32)
    if approximate:
        h = jax.nn.gelu(h, approximate=True)
    else:
        h = 0.5 * h * (1.0 + lax.erf(h / jnp.sqrt(2.0)))
    return h @ w2.astype(jnp.float32) + b2.astype(jnp.float32)


if __name__ == "__main__":
    # Small shapes implied by the module: token-wise MLP.
    batch, seq = 2, 8
    in_dim, hidden_dim, out_dim = 32, 64, 32

    key = jax.random.PRNGKey(0)
    kx, k1, k2, k3, k4 = jax.random.split(key, 5)

    x = jax.random.normal(kx, (batch, seq, in_dim), dtype=jnp.float32)
    # Deterministic "synthetic checkpoint" parameters (stored as (in, out)).
    w1 = jax.random.normal(k1, (in_dim, hidden_dim), dtype=jnp.float32) * 0.05
    b1 = jax.random.normal(k2, (hidden_dim,), dtype=jnp.float32) * 0.05
    w2 = jax.random.normal(k3, (hidden_dim, out_dim), dtype=jnp.float32) * 0.05
    b2 = jax.random.normal(k4, (out_dim,), dtype=jnp.float32) * 0.05

    # f32 path: exact-erf GELU, must match the reference tightly (small K).
    out = mlp_pallas(x, w1, b1, w2, b2)
    jax.block_until_ready(out)
    ref = _reference(x, w1, b1, w2, b2)
    assert out.shape == (batch, seq, out_dim)
    assert jnp.allclose(out, ref, atol=3e-5, rtol=3e-5), "f32 mismatch vs reference"

    # bf16 path: operands go straight to the MXU (tanh GELU via auto mode).
    xb, w1b, b1b, w2b, b2b = (a.astype(jnp.bfloat16) for a in (x, w1, b1, w2, b2))
    out_b = mlp_pallas(xb, w1b, b1b, w2b, b2b)
    jax.block_until_ready(out_b)
    ref_b = _reference(xb, w1b, b1b, w2b, b2b, approximate=True)
    assert out_b.dtype == jnp.bfloat16
    assert jnp.allclose(out_b.astype(jnp.float32), ref_b, atol=5e-2, rtol=5e-2), (
        "bf16 mismatch vs reference"
    )

    # Opt-in fast path: f32 checkpoint, bf16 MXU operands, f32 accumulation.
    out_fast = mlp_pallas(x, w1, b1, w2, b2, cast_to_bf16=True)
    jax.block_until_ready(out_fast)
    ref_fast = _reference(x, w1, b1, w2, b2, approximate=True)
    assert out_fast.dtype == jnp.float32
    assert jnp.allclose(out_fast, ref_fast, atol=5e-2, rtol=5e-2), (
        "cast_to_bf16 mismatch vs reference"
    )

    print("KERNEL_OK")
</pallas_src>

<mosaic_0001>
module attributes {stable_mosaic.version = 11 : i64} {
  func.func @kernel(%arg0: i32, %arg1: i32, %arg2: memref<16x128xf32, #tpu.memory_space<vmem>>, %arg3: memref<128x128xf32, #tpu.memory_space<vmem>>, %arg4: memref<1x128xf32, #tpu.memory_space<vmem>>, %arg5: memref<128x128xf32, #tpu.memory_space<vmem>>, %arg6: memref<1x128xf32, #tpu.memory_space<vmem>>, %arg7: memref<16x128xf32, #tpu.memory_space<vmem>>, %arg8: memref<16x128xf32, #tpu.memory_space<vmem>>) attributes {dimension_semantics = [#tpu.dimension_semantics<parallel>, #tpu.dimension_semantics<arbitrary>], iteration_bounds = array<i64: 1, 1>, scalar_prefetch = 0 : i64, scratch_operands = 1 : i64, tpu.core_type = #tpu.core_type<tc>, window_params = [{transform_indices = @transform_0, window_bounds = array<i64: 16, 128>}, {transform_indices = @transform_1, window_bounds = array<i64: 128, 128>}, {transform_indices = @transform_2, window_bounds = array<i64: 1, 128>}, {transform_indices = @transform_3, window_bounds = array<i64: 128, 128>}, {pipeline_mode = #tpu.pipeline_mode<synchronous>, transform_indices = @transform_4, window_bounds = array<i64: 1, 128>}, {transform_indices = @transform_5, window_bounds = array<i64: 16, 128>}]} {
    %c0_i32 = arith.constant 0 : i32
    %0 = arith.cmpi eq, %arg1, %c0_i32 : i32
    %1 = arith.extui %0 : i1 to i32
    %c0_i32_0 = arith.constant 0 : i32
    %2 = arith.cmpi ne, %1, %c0_i32_0 : i32
    scf.if %2 {
      %cst_16 = arith.constant 0.000000e+00 : f32
      %25 = vector.broadcast %cst_16 : f32 to vector<16x128xf32>
      %c0_17 = arith.constant 0 : index
      %c0_18 = arith.constant 0 : index
      %26 = vector.load %arg8[%c0_17, %c0_18] : memref<16x128xf32, #tpu.memory_space<vmem>>, vector<16x128xf32>
      tpu.vector_store %arg8[%c0_17, %c0_18], %25 {strides = array<i32>} : memref<16x128xf32, #tpu.memory_space<vmem>>, vector<16x128xf32>,
    } else {
    }
    %c0 = arith.constant 0 : index
    %c0_1 = arith.constant 0 : index
    %3 = vector.load %arg2[%c0, %c0_1] : memref<16x128xf32, #tpu.memory_space<vmem>>, vector<16x128xf32>
    %c0_2 = arith.constant 0 : index
    %c0_3 = arith.constant 0 : index
    %4 = vector.load %arg3[%c0_2, %c0_3] : memref<128x128xf32, #tpu.memory_space<vmem>>, vector<128x128xf32>
    %c0_4 = arith.constant 0 : index
    %c0_5 = arith.constant 0 : index
    %5 = vector.load %arg5[%c0_4, %c0_5] : memref<128x128xf32, #tpu.memory_space<vmem>>, vector<128x128xf32>
    %cst = arith.constant dense<0.000000e+00> : vector<16x128xf32>
    %6 = tpu.matmul %3, %4, %cst {dimension_numbers = #tpu.dot_dimension_numbers<[1], [0], [0], [1], [0, 0, 1, 1], [], []>} : vector<16x128xf32>, vector<128x128xf32>, vector<16x128xf32> -> vector<16x128xf32>
    %c0_6 = arith.constant 0 : index
    %c0_7 = arith.constant 0 : index
    %7 = vector.load %arg4[%c0_6, %c0_7] : memref<1x128xf32, #tpu.memory_space<vmem>>, vector<1x128xf32>
    %8 = vector.broadcast %7 : vector<1x128xf32> to vector<16x128xf32>
    %9 = arith.addf %6, %8 : vector<16x128xf32>
    %cst_8 = arith.constant 5.000000e-01 : f32
    %10 = vector.broadcast %cst_8 : f32 to vector<16x128xf32>
    %11 = arith.mulf %10, %9 : vector<16x128xf32>
    %cst_9 = arith.constant 0.707106769 : f32
    %12 = vector.broadcast %cst_9 : f32 to vector<16x128xf32>
    %13 = arith.mulf %9, %12 : vector<16x128xf32>
    %14 = math.erf %13 : vector<16x128xf32>
    %cst_10 = arith.constant 1.000000e+00 : f32
    %15 = vector.broadcast %cst_10 : f32 to vector<16x128xf32>
    %16 = arith.addf %15, %14 : vector<16x128xf32>
    %17 = arith.mulf %11, %16 : vector<16x128xf32>
    %cst_11 = arith.constant dense<0.000000e+00> : vector<16x128xf32>
    %18 = tpu.matmul %17, %5, %cst_11 {dimension_numbers = #tpu.dot_dimension_numbers<[1], [0], [0], [1], [0, 0, 1, 1], [], []>} : vector<16x128xf32>, vector<128x128xf32>, vector<16x128xf32> -> vector<16x128xf32>
    %c0_i32_12 = arith.constant 0 : i32
    %19 = arith.cmpi ne, %arg1, %c0_i32_12 : i32
    %20 = arith.extui %19 : i1 to i32
    %c0_i32_13 = arith.constant 0 : i32
    %21 = arith.cmpi ne, %20, %c0_i32_13 : i32
    scf.if %21 {
      %c0_16 = arith.constant 0 : index
      %c0_17 = arith.constant 0 : index
      %25 = vector.load %arg8[%c0_16, %c0_17] : memref<16x128xf32, #tpu.memory_space<vmem>>, vector<16x128xf32>
      %26 = arith.addf %25, %18 : vector<16x128xf32>
      %c0_18 = arith.constant 0 : index
      %c0_19 = arith.constant 0 : index
      %27 = vector.load %arg8[%c0_18, %c0_19] : memref<16x128xf32, #tpu.memory_space<vmem>>, vector<16x128xf32>
      tpu.vector_store %arg8[%c0_18, %c0_19], %26 {strides = array<i32>} : memref<16x128xf32, #tpu.memory_space<vmem>>, vector<16x128xf32>,
    } else {
    }
    %c0_i32_14 = arith.constant 0 : i32
    %22 = arith.cmpi eq, %arg1, %c0_i32_14 : i32
    %23 = arith.extui %22 : i1 to i32
    %c0_i32_15 = arith.constant 0 : i32
    %24 = arith.cmpi ne, %23, %c0_i32_15 : i32
    scf.if %24 {
      %c0_16 = arith.constant 0 : index
      %c0_17 = arith.constant 0 : index
      %25 = vector.load %arg8[%c0_16, %c0_17] : memref<16x128xf32, #tpu.memory_space<vmem>>, vector<16x128xf32>
      %26 = arith.addf %25, %18 : vector<16x128xf32>
      %c0_18 = arith.constant 0 : index
      %c0_19 = arith.constant 0 : index
      %27 = vector.load %arg6[%c0_18, %c0_19] : memref<1x128xf32, #tpu.memory_space<vmem>>, vector<1x128xf32>
      %28 = vector.broadcast %27 : vector<1x128xf32> to vector<16x128xf32>
      %29 = arith.addf %26, %28 : vector<16x128xf32>
      %c0_20 = arith.constant 0 : index
      %c0_21 = arith.constant 0 : index
      %30 = vector.load %arg7[%c0_20, %c0_21] : memref<16x128xf32, #tpu.memory_space<vmem>>, vector<16x128xf32>
      tpu.vector_store %arg7[%c0_20, %c0_21], %29 {strides = array<i32>} : memref<16x128xf32, #tpu.memory_space<vmem>>, vector<16x128xf32>,
    } else {
    }
    return
  }
  func.func @transform_0(%arg0: i32, %arg1: i32) -> (i32, i32) {
    %c0_i32 = arith.constant 0 : i32
    %c0_i32_0 = arith.constant 0 : i32
    return %arg0, %c0_i32 : i32, i32
  }
  func.func @transform_1(%arg0: i32, %arg1: i32) -> (i32, i32) {
    %c0_i32 = arith.constant 0 : i32
    %c0_i32_0 = arith.constant 0 : i32
    return %c0_i32, %arg1 : i32, i32
  }
  func.func @transform_2(%arg0: i32, %arg1: i32) -> (i32, i32) {
    %c0_i32 = arith.constant 0 : i32
    %c0_i32_0 = arith.constant 0 : i32
    return %c0_i32, %arg1 : i32, i32
  }
  func.func @transform_3(%arg0: i32, %arg1: i32) -> (i32, i32) {
    %c0_i32 = arith.constant 0 : i32
    %c0_i32_0 = arith.constant 0 : i32
    return %arg1, %c0_i32 : i32, i32
  }
  func.func @transform_4(%arg0: i32, %arg1: i32) -> (i32, i32) {
    %c0_i32 = arith.constant 0 : i32
    %c0_i32_0 = arith.constant 0 : i32
    %c0_i32_1 = arith.constant 0 : i32
    return %c0_i32, %c0_i32_0 : i32, i32
  }
  func.func @transform_5(%arg0: i32, %arg1: i32) -> (i32, i32) {
    %c0_i32 = arith.constant 0 : i32
    %c0_i32_0 = arith.constant 0 : i32
    return %arg0, %c0_i32 : i32, i32
  }
}

</mosaic_0001>

<llo_original>
// kernel: _mlp_pallas_impl.1
$region0: #{_mlp_pallas_impl.1}
  #allocation0 [shape = 'u32[]', space=smem, size = 0x4, offset = 0x4, fixed_abs, tag = 'smem constant byte address 0x4 - core index']
  #allocation1 [shape = 'u32[144,128]{1,0:T(1,128)}', space=vmem, size = 0x12000, scoped, tag = 'internal scratch']
  #allocation2 [shape = 'f32[16,128]{1,0:T(8,128)}', space=vmem, size = 0x2000, scoped, tag = 'scratch operand']
  %s0 = inlined_call_operand.vmem [shape: f32[16,128], index: 0, kind: input, shape index: {}]
  %s1 = inlined_call_operand.vmem [shape: f32[128,128], index: 1, kind: input, shape index: {}]
  %s2 = inlined_call_operand.vmem [shape: f32[1,128], index: 2, kind: input, shape index: {}]
  %s3 = inlined_call_operand.vmem [shape: f32[128,128], index: 3, kind: input, shape index: {}]
  %s4 = inlined_call_operand.vmem [shape: f32[1,128], index: 4, kind: input, shape index: {}]
  %s5 = inlined_call_operand.vmem [shape: f32[16,128], index: 5, kind: output, shape index: {}]
  %s6 = sld [smem:[#allocation0]]
  $region42: #{_mlp_pallas_impl.1} parent=0
    _
  %s8 = ssub.s32 1, %s6
  %s9 = scalar_select 0, %s8, %s6
  // Predicated region
  $region2: #{_mlp_pallas_impl.1} parent=0 // pred_check
    _
  $region3: #{_mlp_pallas_impl.1} parent=0 // pred_check_branch
    %11 = sbr.rel (0) target = $region5
  $region4: #{_mlp_pallas_impl.1} parent=0 // pred_region
    _
  $region5: #{_mlp_pallas_impl.1} parent=0 // pred_fallthru
    _
  // Predicated region
  $region6: #{_mlp_pallas_impl.1} parent=0 // pred_check
    _
  $region7: #{_mlp_pallas_impl.1} parent=0 // pred_check_branch
    %13 = sbr.rel (0) target = $region9
  $region8: #{_mlp_pallas_impl.1} parent=0 // pred_region
    _
  $region9: #{_mlp_pallas_impl.1} parent=0 // pred_fallthru
    _
  // Predicated region
  $region10: #{_mlp_pallas_impl.1} parent=0 // pred_check
    _
  $region11: #{_mlp_pallas_impl.1} parent=0 // pred_check_branch
    %15 = sbr.rel (0) target = $region13
  $region12: #{_mlp_pallas_impl.1} parent=0 // pred_region
    _
  $region13: #{_mlp_pallas_impl.1} parent=0 // pred_fallthru
    _
  // Predicated region
  $region14: #{_mlp_pallas_impl.1} parent=0 // pred_check
    _
  $region15: #{_mlp_pallas_impl.1} parent=0 // pred_check_branch
    %17 = sbr.rel (0) target = $region17
  $region16: #{_mlp_pallas_impl.1} parent=0 // pred_region
    _
  $region17: #{_mlp_pallas_impl.1} parent=0 // pred_fallthru
    _
  // Predicated region
  $region18: #{_mlp_pallas_impl.1} parent=0 // pred_check
    _
  $region19: #{_mlp_pallas_impl.1} parent=0 // pred_check_branch
    %19 = sbr.rel (0) target = $region21
  $region20: #{_mlp_pallas_impl.1} parent=0 // pred_region
    _
  $region21: #{_mlp_pallas_impl.1} parent=0 // pred_fallthru
    _
  %p20 = scmp.eq.s32.totalorder 0, 0
  // Predicated region
  $region22: #{_mlp_pallas_impl.1} parent=0 // pred_check
    %p21 = pneg %p20
  $region23: #{_mlp_pallas_impl.1} parent=0 // pred_check_branch
    %23 = sbr.rel (%p21) target = $region25
  $region24: #{_mlp_pallas_impl.1} parent=0 // pred_region
    %24 = vst [vmem:[#allocation2] sm:$0xff] 0.0
    %25 = vst [vmem:[#allocation2 + $0x8] sm:$0xff] 0.0
  $region25: #{_mlp_pallas_impl.1} parent=0 // pred_fallthru
    _
  %v26 = vld [vmem:[%s0] sm:$0xff]
  %v27 = vld [vmem:[%s0 + $0x8] sm:$0xff]
  %v28 = vld [vmem:[%s1] sm:$0xff]
  %v29 = vld [vmem:[%s1 + $0x8] sm:$0xff]
  %v30 = vld [vmem:[%s1 + $0x10] sm:$0xff]
  %v31 = vld [vmem:[%s1 + $0x18] sm:$0xff]
  %v32 = vld [vmem:[%s1 + $0x20] sm:$0xff]
  %v33 = vld [vmem:[%s1 + $0x28] sm:$0xff]
  %v34 = vld [vmem:[%s1 + $0x30] sm:$0xff]
  %v35 = vld [vmem:[%s1 + $0x38] sm:$0xff]
  %v36 = vld [vmem:[%s1 + $0x40] sm:$0xff]
  %v37 = vld [vmem:[%s1 + $0x48] sm:$0xff]
  %v38 = vld [vmem:[%s1 + $0x50] sm:$0xff]
  %v39 = vld [vmem:[%s1 + $0x58] sm:$0xff]
  %v40 = vld [vmem:[%s1 + $0x60] sm:$0xff]
  %v41 = vld [vmem:[%s1 + $0x68] sm:$0xff]
  %v42 = vld [vmem:[%s1 + $0x70] sm:$0xff]
  %v43 = vld [vmem:[%s1 + $0x78] sm:$0xff]
  %v44 = vld [vmem:[%s3] sm:$0xff]
  %v45 = vld [vmem:[%s3 + $0x8] sm:$0xff]
  %v46 = vld [vmem:[%s3 + $0x10] sm:$0xff]
  %v47 = vld [vmem:[%s3 + $0x18] sm:$0xff]
  %v48 = vld [vmem:[%s3 + $0x20] sm:$0xff]
  %v49 = vld [vmem:[%s3 + $0x28] sm:$0xff]
  %v50 = vld [vmem:[%s3 + $0x30] sm:$0xff]
  %v51 = vld [vmem:[%s3 + $0x38] sm:$0xff]
  %v52 = vld [vmem:[%s3 + $0x40] sm:$0xff]
  %v53 = vld [vmem:[%s3 + $0x48] sm:$0xff]
  %v54 = vld [vmem:[%s3 + $0x50] sm:$0xff]
  %v55 = vld [vmem:[%s3 + $0x58] sm:$0xff]
  %v56 = vld [vmem:[%s3 + $0x60] sm:$0xff]
  %v57 = vld [vmem:[%s3 + $0x68] sm:$0xff]
  %v58 = vld [vmem:[%s3 + $0x70] sm:$0xff]
  %v59 = vld [vmem:[%s3 + $0x78] sm:$0xff]
  %v60 = vld [vmem:[%s2] sm:$0x1]
  %v62 = vlaneseq
  %v63 = vshrl.u32 %v62, 7
  %v64 = vsub.s32 0, %v63
  %v65 = vrot.slane %v60, %v64
  %67 = vmatprep.subr.mxu0 0.0
  %68 = vmatpush1.msra.mxu0 %v28
  %69 = vmatprep.subr.mxu0 0.0
  %70 = vmatpush1.msra.mxu0 %v29
  %71 = vmatprep.subr.mxu0 0.0
  %72 = vmatpush1.msra.mxu0 %v30
  %73 = vmatprep.subr.mxu0 0.0
  %74 = vmatpush1.msra.mxu0 %v31
  %75 = vmatprep.subr.mxu0 0.0
  %76 = vmatpush1.msra.mxu0 %v32
  %77 = vmatprep.subr.mxu0 0.0
  %78 = vmatpush1.msra.mxu0 %v33
  %79 = vmatprep.subr.mxu0 0.0
  %80 = vmatpush1.msra.mxu0 %v34
  %81 = vmatprep.subr.mxu0 0.0
  %82 = vmatpush1.msra.mxu0 %v35
  %83 = vmatprep.subr.mxu0 0.0
  %84 = vmatpush1.msra.mxu0 %v36
  %85 = vmatprep.subr.mxu0 0.0
  %86 = vmatpush1.msra.mxu0 %v37
  %87 = vmatprep.subr.mxu0 0.0
  %88 = vmatpush1.msra.mxu0 %v38
  %89 = vmatprep.subr.mxu0 0.0
  %90 = vmatpush1.msra.mxu0 %v39
  %91 = vmatprep.subr.mxu0 0.0
  %92 = vmatpush1.msra.mxu0 %v40
  %93 = vmatprep.subr.mxu0 0.0
  %94 = vmatpush1.msra.mxu0 %v41
  %95 = vmatprep.subr.mxu0 0.0
  %96 = vmatpush1.msra.mxu0 %v42
  %97 = vmatprep.subr.mxu0 0.0
  %98 = vmatpush1.msra.mxu0 %v43
  %99 = vmatprep.subr.mxu0 0.0
  %100 = vmatpush1.msra.mxu0 0.0
  %101 = vmatprep.subr.mxu0 0.0
  %102 = vmatpush1.msra.mxu0 0.0
  %103 = vmatprep.subr.mxu0 0.0
  %104 = vmatpush1.msra.mxu0 0.0
  %105 = vmatprep.subr.mxu0 0.0
  %106 = vmatpush1.msra.mxu0 0.0
  %107 = vmatprep.subr.mxu0 0.0
  %108 = vmatpush1.msra.mxu0 0.0
  %109 = vmatprep.subr.mxu0 0.0
  %110 = vmatpush1.msra.mxu0 0.0
  %111 = vmatprep.subr.mxu0 0.0
  %112 = vmatpush1.msra.mxu0 0.0
  %113 = vmatprep.subr.mxu0 0.0
  %114 = vmatpush1.msra.mxu0 0.0
  %115 = vmatprep.subr.mxu0 0.0
  %116 = vmatpush1.msra.mxu0 0.0
  %117 = vmatprep.subr.mxu0 0.0
  %118 = vmatpush1.msra.mxu0 0.0
  %119 = vmatprep.subr.mxu0 0.0
  %120 = vmatpush1.msra.mxu0 0.0
  %121 = vmatprep.subr.mxu0 0.0
  %122 = vmatpush1.msra.mxu0 0.0
  %123 = vmatprep.subr.mxu0 0.0
  %124 = vmatpush1.msra.mxu0 0.0
  %125 = vmatprep.subr.mxu0 0.0
  %126 = vmatpush1.msra.mxu0 0.0
  %127 = vmatprep.subr.mxu0 0.0
  %128 = vmatpush1.msra.mxu0 0.0
  %129 = vmatprep.subr.mxu0 0.0
  %130 = vmatpush1.msra.mxu0 0.0
  %131 = vmatprep.mubr.f32.mxu0 0.0
  %132 = vmatmul.mubr.f32.gmra.mrb[0].mxu0 %v26
  %v133 = vpop.f32.mrb[0].mxu0
  %v134 = vadd.f32 %v65, %v133
  %v135 = vpop.f32.mrb[0].mxu0
  %136 = vmatprep.mubr.f32.mxu0 0.0
  %137 = vmatmul.mubr.f32.gmra.mrb[0].mxu0 %v27
  %v138 = vpop.f32.mrb[0].mxu0
  %v139 = vadd.f32 %v65, %v138
  %v140 = vpop.f32.mrb[0].mxu0
  %141 = vdwg.mxu0
  %v142 = vmul.f32 %v134, 0.5
  %v143 = vmul.f32 %v139, 0.5
  %v144 = vmul.f32 %v134, 0.70710677
  %v145 = vmul.f32 %v139, 0.70710677
  %v146 = verf.f32.pop %v144
  %v147 = verf.f32.pop %v145
  %v148 = vadd.f32 %v146, 1.0
  %v149 = vadd.f32 %v147, 1.0
  %v150 = vmul.f32 %v142, %v148
  %v151 = vmul.f32 %v143, %v149
  %152 = vmatprep.subr.mxu0 0.0
  %153 = vmatpush1.msra.mxu0 %v44
  %154 = vmatprep.subr.mxu0 0.0
  %155 = vmatpush1.msra.mxu0 %v45
  %156 = vmatprep.subr.mxu0 0.0
  %157 = vmatpush1.msra.mxu0 %v46
  %158 = vmatprep.subr.mxu0 0.0
  %159 = vmatpush1.msra.mxu0 %v47
  %160 = vmatprep.subr.mxu0 0.0
  %161 = vmatpush1.msra.mxu0 %v48
  %162 = vmatprep.subr.mxu0 0.0
  %163 = vmatpush1.msra.mxu0 %v49
  %164 = vmatprep.subr.mxu0 0.0
  %165 = vmatpush1.msra.mxu0 %v50
  %166 = vmatprep.subr.mxu0 0.0
  %167 = vmatpush1.msra.mxu0 %v51
  %168 = vmatprep.subr.mxu0 0.0
  %169 = vmatpush1.msra.mxu0 %v52
  %170 = vmatprep.subr.mxu0 0.0
  %171 = vmatpush1.msra.mxu0 %v53
  %172 = vmatprep.subr.mxu0 0.0
  %173 = vmatpush1.msra.mxu0 %v54
  %174 = vmatprep.subr.mxu0 0.0
  %175 = vmatpush1.msra.mxu0 %v55
  %176 = vmatprep.subr.mxu0 0.0
  %177 = vmatpush1.msra.mxu0 %v56
  %178 = vmatprep.subr.mxu0 0.0
  %179 = vmatpush1.msra.mxu0 %v57
  %180 = vmatprep.subr.mxu0 0.0
  %181 = vmatpush1.msra.mxu0 %v58
  %182 = vmatprep.subr.mxu0 0.0
  %183 = vmatpush1.msra.mxu0 %v59
  %184 = vmatprep.subr.mxu0 0.0
  %185 = vmatpush1.msra.mxu0 0.0
  %186 = vmatprep.subr.mxu0 0.0
  %187 = vmatpush1.msra.mxu0 0.0
  %188 = vmatprep.subr.mxu0 0.0
  %189 = vmatpush1.msra.mxu0 0.0
  %190 = vmatprep.subr.mxu0 0.0
  %191 = vmatpush1.msra.mxu0 0.0
  %192 = vmatprep.subr.mxu0 0.0
  %193 = vmatpush1.msra.mxu0 0.0
  %194 = vmatprep.subr.mxu0 0.0
  %195 = vmatpush1.msra.mxu0 0.0
  %196 = vmatprep.subr.mxu0 0.0
  %197 = vmatpush1.msra.mxu0 0.0
  %198 = vmatprep.subr.mxu0 0.0
  %199 = vmatpush1.msra.mxu0 0.0
  %200 = vmatprep.subr.mxu0 0.0
  %201 = vmatpush1.msra.mxu0 0.0
  %202 = vmatprep.subr.mxu0 0.0
  %203 = vmatpush1.msra.mxu0 0.0
  %204 = vmatprep.subr.mxu0 0.0
  %205 = vmatpush1.msra.mxu0 0.0
  %206 = vmatprep.subr.mxu0 0.0
  %207 = vmatpush1.msra.mxu0 0.0
  %208 = vmatprep.subr.mxu0 0.0
  %209 = vmatpush1.msra.mxu0 0.0
  %210 = vmatprep.subr.mxu0 0.0
  %211 = vmatpush1.msra.mxu0 0.0
  %212 = vmatprep.subr.mxu0 0.0
  %213 = vmatpush1.msra.mxu0 0.0
  %214 = vmatprep.subr.mxu0 0.0
  %215 = vmatpush1.msra.mxu0 0.0
  %216 = vmatprep.mubr.f32.mxu0 0.0
  %217 = vmatmul.mubr.f32.gmra.mrb[0].mxu0 %v150
  %v218 = vpop.f32.mrb[0].mxu0
  %v219 = vadd.f32 0.0, %v218
  %v220 = vpop.f32.mrb[0].mxu0
  %221 = vmatprep.mubr.f32.mxu0 0.0
  %222 = vmatmul.mubr.f32.gmra.mrb[0].mxu0 %v151
  %v223 = vpop.f32.mrb[0].mxu0
  %v224 = vadd.f32 0.0, %v223
  %v225 = vpop.f32.mrb[0].mxu0
  %226 = vdwg.mxu0
  %p227 = scmp.ne.s32.totalorder 0, 0
  // Predicated region
  $region26: #{_mlp_pallas_impl.1} parent=0 // pred_check
    %p228 = pneg %p227
  $region27: #{_mlp_pallas_impl.1} parent=0 // pred_check_branch
    %230 = sbr.rel (%p228) target = $region29
  $region28: #{_mlp_pallas_impl.1} parent=0 // pred_region
    %v231 = vld [vmem:[#allocation2] sm:$0xff]
    %v232 = vld [vmem:[#allocation2 + $0x8] sm:$0xff]
    %v233 = vadd.f32 %v231, %v219
    %v234 = vadd.f32 %v232, %v224
    %235 = vst [vmem:[#allocation2] sm:$0xff] %v233
    %236 = vst [vmem:[#allocation2 + $0x8] sm:$0xff] %v234
  $region29: #{_mlp_pallas_impl.1} parent=0 // pred_fallthru
    _
  // Predicated region
  $region30: #{_mlp_pallas_impl.1} parent=0 // pred_check
    %p237 = pneg %p20
  $region31: #{_mlp_pallas_impl.1} parent=0 // pred_check_branch
    %239 = sbr.rel (%p237) target = $region33
  $region32: #{_mlp_pallas_impl.1} parent=0 // pred_region
    %v240 = vld [vmem:[#allocation2] sm:$0xff]
    %v241 = vld [vmem:[#allocation2 + $0x8] sm:$0xff]
    %v242 = vadd.f32 %v240, %v219
    %v243 = vadd.f32 %v241, %v224
    %v244 = vld [vmem:[%s4] sm:$0x1]
    %v246 = vlaneseq
    %v247 = vshrl.u32 %v246, 7
    %v248 = vsub.s32 0, %v247
    %v249 = vrot.slane %v244, %v248
    %v251 = vadd.f32 %v242, %v249
    %v252 = vadd.f32 %v243, %v249
    %253 = vst [vmem:[%s5] sm:$0xff] %v251
    %254 = vst [vmem:[%s5 + $0x8] sm:$0xff] %v252
  $region33: #{_mlp_pallas_impl.1} parent=0 // pred_fallthru
    _
  // Predicated region
  $region34: #{_mlp_pallas_impl.1} parent=0 // pred_check
    _
  $region35: #{_mlp_pallas_impl.1} parent=0 // pred_check_branch
    %256 = sbr.rel (0) target = $region37
  $region36: #{_mlp_pallas_impl.1} parent=0 // pred_region
    _
  $region37: #{_mlp_pallas_impl.1} parent=0 // pred_fallthru
    _
  // Predicated region
  $region38: #{_mlp_pallas_impl.1} parent=0 // pred_check
    _
  $region39: #{_mlp_pallas_impl.1} parent=0 // pred_check_branch
    %258 = sbr.rel (0) target = $region41
  $region40: #{_mlp_pallas_impl.1} parent=0 // pred_region
    _
  $region41: #{_mlp_pallas_impl.1} parent=0 // pred_fallthru
    _

</llo_original>
